<compile_context>
chip_gen: v5e
topology: v5e:2x2
jax: 0.10.0
libtpu: 0.0.40
codegen_flags: <defaults>
</compile_context>

<pallas_src>
import functools

import jax
import jax.numpy as jnp
from jax.experimental import pallas as pl
from jax.experimental.pallas import tpu as pltpu


def _round_up(x, m):
    return ((x + m - 1) // m) * m


def _cdiv(a, b):
    return -(-a // b)


def _ann_fused_kernel(x_ref, w0_ref, b0_ref, w_ref, b_ref, o_ref, *,
                      n_layers, mxu_dtype):
    """Fused ANN forward for one (tm, K) row block of X.

    Grid = (M_steps,).  W0/b0/W/b have constant block indices -> resident in
    VMEM across the whole grid; X is the only streamed input.  fc0 is one
    full-K GEMM; the relu -> fc chain runs fully on-chip.
    """
    # fc0: (tm, K) @ (K, N) with f32 accumulation on the MXU.
    y = jnp.dot(
        x_ref[...].astype(mxu_dtype), w0_ref[...],
        preferred_element_type=jnp.float32,
    ) + b0_ref[...]

    # dropout (eval mode) == identity; relu fused.  n_layers is a small static
    # Python int -> unrolled.
    for _ in range(n_layers - 1):
        y = jnp.dot(
            jnp.maximum(y, 0.0).astype(mxu_dtype), w_ref[...],
            preferred_element_type=jnp.float32,
        ) + b_ref[...]

    o_ref[...] = y.astype(o_ref.dtype)


def ann_forward(x, w0, b0, w, b, *, n_layers, mxu_dtype=jnp.bfloat16,
                tm_max=512, x_vmem_budget=16 * 1024 * 1024):
    """Fused ANN forward.

    x  : (..., K) float32
    w0 : (K, N)   fc0 weight, stored transposed vs. PyTorch
    b0 : (N,)     fc0 bias
    w  : (N, N)   fc  weight, stored transposed vs. PyTorch
    b  : (N,)     fc  bias
    mxu_dtype : dtype fed to the MXU (bf16 by default; f32 accumulation).
    """
    lead = x.shape[:-1]
    K = x.shape[-1]
    N = w0.shape[1]
    x2d = x.reshape(-1, K)
    M = x2d.shape[0]

    x_bytes = x2d.dtype.itemsize
    w_bytes = jnp.dtype(mxu_dtype).itemsize

    # ---- alignment targets (pad only if actually ragged) ---------------------
    K_al = _round_up(K, 128)
    N_al = _round_up(N, 128)

    # ---- M tiling: full-K X blocks, double-buffered within x_vmem_budget -----
    tm_cap = x_vmem_budget // (2 * K_al * x_bytes)
    tm_cap = max(8, min(tm_max, (tm_cap // 8) * 8))
    if M <= tm_cap:
        tm = _round_up(M, 8)
        steps = 1
    else:
        steps = _cdiv(M, tm_cap)
        if steps % 2 == 1:
            steps += 1                 # even step count: keep both v7x TCs busy
        tm = _round_up(_cdiv(M, steps), 8)
    M_pad = tm * steps

    # ---- inputs: avoid any HBM copy of X when shapes are already aligned -----
    if (M_pad, K_al) != (M, K):
        x_p = jnp.pad(x2d, ((0, M_pad - M), (0, K_al - K)))
    else:
        x_p = x2d

    w0_p = w0.astype(mxu_dtype)
    if (K_al, N_al) != (K, N):
        w0_p = jnp.pad(w0_p, ((0, K_al - K), (0, N_al - N)))
    w_p = w.astype(mxu_dtype)
    b0_p = b0.astype(jnp.float32).reshape(1, N)
    b_p = b.astype(jnp.float32).reshape(1, N)
    if N_al != N:
        w_p = jnp.pad(w_p, ((0, N_al - N), (0, N_al - N)))
        b0_p = jnp.pad(b0_p, ((0, 0), (0, N_al - N)))
        b_p = jnp.pad(b_p, ((0, 0), (0, N_al - N)))

    # ---- VMEM budget (explicit; v5e default is only 16 MiB scoped) -----------
    vmem_bytes = (2 * tm * K_al * x_bytes        # double-buffered X tile
                  + 2 * K_al * N_al * w_bytes    # resident W0 (worst case 2 bufs)
                  + 2 * N_al * N_al * w_bytes    # resident W
                  + 2 * tm * N_al * 4            # double-buffered out tile
                  + 4 * N_al * 4)                # biases
    vmem_limit = min(_round_up(vmem_bytes, 1 << 20) + (6 << 20), 64 << 20)

    flops = 2 * M_pad * K_al * N_al + (n_layers - 1) * 2 * M_pad * N_al * N_al
    bytes_accessed = (M_pad * K_al * x_bytes + K_al * N_al * w_bytes
                      + N_al * N_al * w_bytes + 2 * N_al * 4
                      + M_pad * N_al * 4)
    cost = pl.CostEstimate(flops=flops, transcendentals=0,
                           bytes_accessed=bytes_accessed)

    kernel = functools.partial(_ann_fused_kernel, n_layers=n_layers,
                               mxu_dtype=mxu_dtype)

    out = pl.pallas_call(
        kernel,
        out_shape=jax.ShapeDtypeStruct((M_pad, N_al), jnp.float32),
        grid_spec=pltpu.PrefetchScalarGridSpec(
            num_scalar_prefetch=0,
            grid=(steps,),
            in_specs=[
                pl.BlockSpec((tm, K_al), lambda i: (i, 0)),     # X   (streamed)
                pl.BlockSpec((K_al, N_al), lambda i: (0, 0)),   # W0  (resident)
                pl.BlockSpec((1, N_al), lambda i: (0, 0)),      # b0  (resident)
                pl.BlockSpec((N_al, N_al), lambda i: (0, 0)),   # W   (resident)
                pl.BlockSpec((1, N_al), lambda i: (0, 0)),      # b   (resident)
            ],
            out_specs=pl.BlockSpec((tm, N_al), lambda i: (i, 0)),
        ),
        compiler_params=pltpu.CompilerParams(
            dimension_semantics=("parallel",),
            vmem_limit_bytes=vmem_limit,
        ),
        cost_estimate=cost,
    )(x_p, w0_p, b0_p, w_p, b_p)

    return out[:M, :N].reshape(*lead, N)


class ANNPallas:
    """JAX/Pallas reimplementation of the PyTorch ANN module (eval mode)."""

    def __init__(self, input_size=4096, reduced_size=128, n_ANNlayers=1,
                 dropout_p=0.5, key=None):
        self.n_ANNlayers = n_ANNlayers
        if key is None:
            key = jax.random.PRNGKey(0)
        k0, k1, k2, k3 = jax.random.split(key, 4)

        # Deterministic init mimicking nn.Linear's U(-1/sqrt(fan_in), 1/sqrt(fan_in)).
        lim0 = 1.0 / (input_size ** 0.5)
        lim1 = 1.0 / (reduced_size ** 0.5)
        # Stored as (in_features, out_features): W = W_pytorch.T
        self.w0 = jax.random.uniform(k0, (input_size, reduced_size), jnp.float32,
                                     -lim0, lim0)
        self.b0 = jax.random.uniform(k1, (reduced_size,), jnp.float32, -lim0, lim0)
        self.w = jax.random.uniform(k2, (reduced_size, reduced_size), jnp.float32,
                                    -lim1, lim1)
        self.b = jax.random.uniform(k3, (reduced_size,), jnp.float32, -lim1, lim1)

        self._fwd = jax.jit(
            functools.partial(ann_forward, n_layers=n_ANNlayers)
        )

    def __call__(self, x):
        return self._fwd(x, self.w0, self.b0, self.w, self.b)


def _ref_forward(x, w0, b0, w, b, n_layers):
    y = x @ w0 + b0
    for _ in range(n_layers - 1):
        y = jnp.maximum(y, 0.0) @ w + b
    return y


if __name__ == "__main__":
    key = jax.random.PRNGKey(0)

    # Case 1: small, module-consistent shapes; fc0 + the fc loop (bf16 MXU path).
    batch, seq, input_size, reduced_size = 2, 8, 512, 128
    kx, kp, key = jax.random.split(key, 3)
    x = jax.random.normal(kx, (batch, seq, input_size), jnp.float32)
    model = ANNPallas(input_size=input_size, reduced_size=reduced_size,
                      n_ANNlayers=2, key=kp)
    out = jax.block_until_ready(model(x))
    ref = _ref_forward(x, model.w0, model.b0, model.w, model.b, 2)
    assert out.shape == (batch, seq, reduced_size)
    assert jnp.allclose(out, ref, atol=3e-2, rtol=3e-2)   # bf16 operands, f32 acc

    # Case 1b: exact fp32 MXU path must match the reference tightly.
    fwd_f32 = jax.jit(functools.partial(ann_forward, n_layers=2,
                                        mxu_dtype=jnp.float32))
    out_f32 = jax.block_until_ready(
        fwd_f32(x, model.w0, model.b0, model.w, model.b))
    assert jnp.allclose(out_f32, ref, atol=1e-4, rtol=1e-4)

    # Case 2: ragged shapes (M not a multiple of 8, K not a multiple of 128)
    #         + deeper fc chain (pad-only-when-ragged path).
    batch, seq, input_size, reduced_size = 3, 5, 2000, 96
    kx, kp, key = jax.random.split(key, 3)
    x = jax.random.normal(kx, (batch, seq, input_size), jnp.float32)
    model = ANNPallas(input_size=input_size, reduced_size=reduced_size,
                      n_ANNlayers=3, key=kp)
    out = jax.block_until_ready(model(x))
    ref = _ref_forward(x, model.w0, model.b0, model.w, model.b, 3)
    assert out.shape == (batch, seq, reduced_size)
    assert jnp.allclose(out, ref, atol=3e-2, rtol=3e-2)

    # Case 3: n_ANNlayers = 1 (fc0 only).
    kx, kp, key = jax.random.split(key, 3)
    x = jax.random.normal(kx, (2, 8, 512), jnp.float32)
    model = ANNPallas(input_size=512, reduced_size=128, n_ANNlayers=1, key=kp)
    out = jax.block_until_ready(model(x))
    ref = _ref_forward(x, model.w0, model.b0, model.w, model.b, 1)
    assert jnp.allclose(out, ref, atol=3e-2, rtol=3e-2)

    print("KERNEL_OK")
</pallas_src>

<mosaic_0001>
module attributes {stable_mosaic.version = 11 : i64} {
  func.func @_ann_fused_kernel(%arg0: i32, %arg1: memref<16x512xf32, #tpu.memory_space<vmem>>, %arg2: memref<512x128xbf16, #tpu.memory_space<vmem>>, %arg3: memref<1x128xf32, #tpu.memory_space<vmem>>, %arg4: memref<128x128xbf16, #tpu.memory_space<vmem>>, %arg5: memref<1x128xf32, #tpu.memory_space<vmem>>, %arg6: memref<16x128xf32, #tpu.memory_space<vmem>>) attributes {dimension_semantics = [#tpu.dimension_semantics<parallel>], iteration_bounds = array<i64: 1>, scalar_prefetch = 0 : i64, scratch_operands = 0 : i64, tpu.core_type = #tpu.core_type<tc>, window_params = [{transform_indices = @transform_0, window_bounds = array<i64: 16, 512>}, {pipeline_mode = #tpu.pipeline_mode<synchronous>, transform_indices = @transform_1, window_bounds = array<i64: 512, 128>}, {pipeline_mode = #tpu.pipeline_mode<synchronous>, transform_indices = @transform_2, window_bounds = array<i64: 1, 128>}, {pipeline_mode = #tpu.pipeline_mode<synchronous>, transform_indices = @transform_3, window_bounds = array<i64: 128, 128>}, {pipeline_mode = #tpu.pipeline_mode<synchronous>, transform_indices = @transform_4, window_bounds = array<i64: 1, 128>}, {transform_indices = @transform_5, window_bounds = array<i64: 16, 128>}]} {
    %c0 = arith.constant 0 : index
    %c0_0 = arith.constant 0 : index
    %0 = vector.load %arg1[%c0, %c0_0] : memref<16x512xf32, #tpu.memory_space<vmem>>, vector<16x512xf32>
    %1 = arith.truncf %0 : vector<16x512xf32> to vector<16x512xbf16>
    %c0_1 = arith.constant 0 : index
    %c0_2 = arith.constant 0 : index
    %2 = vector.load %arg2[%c0_1, %c0_2] : memref<512x128xbf16, #tpu.memory_space<vmem>>, vector<512x128xbf16>
    %cst = arith.constant dense<0.000000e+00> : vector<16x128xf32>
    %3 = tpu.matmul %1, %2, %cst {dimension_numbers = #tpu.dot_dimension_numbers<[1], [0], [0], [1], [0, 0, 1, 1], [], []>} : vector<16x512xbf16>, vector<512x128xbf16>, vector<16x128xf32> -> vector<16x128xf32>
    %c0_3 = arith.constant 0 : index
    %c0_4 = arith.constant 0 : index
    %4 = vector.load %arg3[%c0_3, %c0_4] : memref<1x128xf32, #tpu.memory_space<vmem>>, vector<1x128xf32>
    %5 = vector.broadcast %4 : vector<1x128xf32> to vector<16x128xf32>
    %6 = arith.addf %3, %5 : vector<16x128xf32>
    %cst_5 = arith.constant 0.000000e+00 : f32
    %7 = vector.broadcast %cst_5 : f32 to vector<16x128xf32>
    %8 = arith.maximumf %6, %7 : vector<16x128xf32>
    %9 = arith.truncf %8 : vector<16x128xf32> to vector<16x128xbf16>
    %c0_6 = arith.constant 0 : index
    %c0_7 = arith.constant 0 : index
    %10 = vector.load %arg4[%c0_6, %c0_7] : memref<128x128xbf16, #tpu.memory_space<vmem>>, vector<128x128xbf16>
    %cst_8 = arith.constant dense<0.000000e+00> : vector<16x128xf32>
    %11 = tpu.matmul %9, %10, %cst_8 {dimension_numbers = #tpu.dot_dimension_numbers<[1], [0], [0], [1], [0, 0, 1, 1], [], []>} : vector<16x128xbf16>, vector<128x128xbf16>, vector<16x128xf32> -> vector<16x128xf32>
    %c0_9 = arith.constant 0 : index
    %c0_10 = arith.constant 0 : index
    %12 = vector.load %arg5[%c0_9, %c0_10] : memref<1x128xf32, #tpu.memory_space<vmem>>, vector<1x128xf32>
    %13 = vector.broadcast %12 : vector<1x128xf32> to vector<16x128xf32>
    %14 = arith.addf %11, %13 : vector<16x128xf32>
    %c0_11 = arith.constant 0 : index
    %c0_12 = arith.constant 0 : index
    %15 = vector.load %arg6[%c0_11, %c0_12] : memref<16x128xf32, #tpu.memory_space<vmem>>, vector<16x128xf32>
    tpu.vector_store %arg6[%c0_11, %c0_12], %14 {strides = array<i32>} : memref<16x128xf32, #tpu.memory_space<vmem>>, vector<16x128xf32>,
    return
  }
  func.func @transform_0(%arg0: i32) -> (i32, i32) {
    %c0_i32 = arith.constant 0 : i32
    %c0_i32_0 = arith.constant 0 : i32
    return %arg0, %c0_i32 : i32, i32
  }
  func.func @transform_1(%arg0: i32) -> (i32, i32) {
    %c0_i32 = arith.constant 0 : i32
    %c0_i32_0 = arith.constant 0 : i32
    %c0_i32_1 = arith.constant 0 : i32
    return %c0_i32, %c0_i32_0 : i32, i32
  }
  func.func @transform_2(%arg0: i32) -> (i32, i32) {
    %c0_i32 = arith.constant 0 : i32
    %c0_i32_0 = arith.constant 0 : i32
    %c0_i32_1 = arith.constant 0 : i32
    return %c0_i32, %c0_i32_0 : i32, i32
  }
  func.func @transform_3(%arg0: i32) -> (i32, i32) {
    %c0_i32 = arith.constant 0 : i32
    %c0_i32_0 = arith.constant 0 : i32
    %c0_i32_1 = arith.constant 0 : i32
    return %c0_i32, %c0_i32_0 : i32, i32
  }
  func.func @transform_4(%arg0: i32) -> (i32, i32) {
    %c0_i32 = arith.constant 0 : i32
    %c0_i32_0 = arith.constant 0 : i32
    %c0_i32_1 = arith.constant 0 : i32
    return %c0_i32, %c0_i32_0 : i32, i32
  }
  func.func @transform_5(%arg0: i32) -> (i32, i32) {
    %c0_i32 = arith.constant 0 : i32
    %c0_i32_0 = arith.constant 0 : i32
    return %arg0, %c0_i32 : i32, i32
  }
}

</mosaic_0001>

<llo_original>
// kernel: ann_forward.1
$region0: #{ann_forward.1}
  #allocation0 [shape = 'u32[]', space=smem, size = 0x4, offset = 0x4, fixed_abs, tag = 'smem constant byte address 0x4 - core index']
  #allocation1 [shape = 'u32[72,128]{1,0:T(1,128)}', space=vmem, size = 0x9000, scoped, tag = 'internal scratch']
  %s0 = inlined_call_operand.vmem [shape: f32[16,512], index: 0, kind: input, shape index: {}]
  %s1 = inlined_call_operand.vmem [shape: bf16[512,128], index: 1, kind: input, shape index: {}]
  %s2 = inlined_call_operand.vmem [shape: f32[1,128], index: 2, kind: input, shape index: {}]
  %s3 = inlined_call_operand.vmem [shape: bf16[128,128], index: 3, kind: input, shape index: {}]
  %s4 = inlined_call_operand.vmem [shape: f32[1,128], index: 4, kind: input, shape index: {}]
  %s5 = inlined_call_operand.hbm [shape: f32[16,128], index: 5, kind: output, shape index: {}]
  %s6 = sld [smem:[#allocation0]]
  $region30: #{ann_forward.1} parent=0
    _
  %s8 = ssub.s32 1, %s6
  %s9 = scalar_select 0, %s8, %s6
  $region1: #{ann_forward.1} parent=0
    #allocation2 [shape = 'u8[8192]{0}', space=vmem, size = 0x2000, scoped, tag = 'output window, operand 0, single buffered']
    #allocation3 [shape = 's32[1]{0}', space=sflag, size = 0x4, scoped, tag = 'scoped memory for ann_forward.1']
    %10 = vsyncpa [#allocation3], 0
    // Predicated region
    $region2: #{ann_forward.1} parent=1 // pred_check
      _
    $region3: #{ann_forward.1} parent=1 // pred_check_branch
      %12 = sbr.rel (0) target = $region5
    $region4: #{ann_forward.1} parent=1 // pred_region
      _
    $region5: #{ann_forward.1} parent=1 // pred_fallthru
      _
    // Predicated region
    $region6: #{ann_forward.1} parent=1 // pred_check
      _
    $region7: #{ann_forward.1} parent=1 // pred_check_branch
      %14 = sbr.rel (0) target = $region9
    $region8: #{ann_forward.1} parent=1 // pred_region
      _
    $region9: #{ann_forward.1} parent=1 // pred_fallthru
      _
    // Predicated region
    $region10: #{ann_forward.1} parent=1 // pred_check
      _
    $region11: #{ann_forward.1} parent=1 // pred_check_branch
      %16 = sbr.rel (0) target = $region13
    $region12: #{ann_forward.1} parent=1 // pred_region
      _
    $region13: #{ann_forward.1} parent=1 // pred_fallthru
      _
    // Predicated region
    $region14: #{ann_forward.1} parent=1 // pred_check
      _
    $region15: #{ann_forward.1} parent=1 // pred_check_branch
      %18 = sbr.rel (0) target = $region17
    $region16: #{ann_forward.1} parent=1 // pred_region
      _
    $region17: #{ann_forward.1} parent=1 // pred_fallthru
      _
    // Predicated region
    $region18: #{ann_forward.1} parent=1 // pred_check
      _
    $region19: #{ann_forward.1} parent=1 // pred_check_branch
      %20 = sbr.rel (0) target = $region21
    $region20: #{ann_forward.1} parent=1 // pred_region
      _
    $region21: #{ann_forward.1} parent=1 // pred_fallthru
      _
    %v21 = vld [vmem:[%s0] sm:$0xff]
    %v22 = vld [vmem:[%s0 + $0x8] sm:$0xff]
    %v23 = vld [vmem:[%s0 + $0x10] sm:$0xff]
    %v24 = vld [vmem:[%s0 + $0x18] sm:$0xff]
    %v25 = vld [vmem:[%s0 + $0x20] sm:$0xff]
    %v26 = vld [vmem:[%s0 + $0x28] sm:$0xff]
    %v27 = vld [vmem:[%s0 + $0x30] sm:$0xff]
    %v28 = vld [vmem:[%s0 + $0x38] sm:$0xff]
    %v29 = vpack.c.bf16 %v25, %v21
    %v30 = vpack.c.bf16 %v26, %v22
    %v31 = vpack.c.bf16 %v27, %v23
    %v32 = vpack.c.bf16 %v28, %v24
    %v33 = vld [vmem:[%s1] sm:$0xf]
    %v34 = vld [vmem:[%s1 + $0x4] sm:$0xf]
    %v35 = vld [vmem:[%s1 + $0x8] sm:$0xf]
    %v36 = vld [vmem:[%s1 + $0xc] sm:$0xf]
    %v37 = vld [vmem:[%s1 + $0x10] sm:$0xf]
    %v38 = vld [vmem:[%s1 + $0x14] sm:$0xf]
    %v39 = vld [vmem:[%s1 + $0x18] sm:$0xf]
    %v40 = vld [vmem:[%s1 + $0x1c] sm:$0xf]
    %v41 = vld [vmem:[%s1 + $0x20] sm:$0xf]
    %v42 = vld [vmem:[%s1 + $0x24] sm:$0xf]
    %v43 = vld [vmem:[%s1 + $0x28] sm:$0xf]
    %v44 = vld [vmem:[%s1 + $0x2c] sm:$0xf]
    %v45 = vld [vmem:[%s1 + $0x30] sm:$0xf]
    %v46 = vld [vmem:[%s1 + $0x34] sm:$0xf]
    %v47 = vld [vmem:[%s1 + $0x38] sm:$0xf]
    %v48 = vld [vmem:[%s1 + $0x3c] sm:$0xf]
    %v49 = vld [vmem:[%s1 + $0x40] sm:$0xf]
    %v50 = vld [vmem:[%s1 + $0x44] sm:$0xf]
    %v51 = vld [vmem:[%s1 + $0x48] sm:$0xf]
    %v52 = vld [vmem:[%s1 + $0x4c] sm:$0xf]
    %v53 = vld [vmem:[%s1 + $0x50] sm:$0xf]
    %v54 = vld [vmem:[%s1 + $0x54] sm:$0xf]
    %v55 = vld [vmem:[%s1 + $0x58] sm:$0xf]
    %v56 = vld [vmem:[%s1 + $0x5c] sm:$0xf]
    %v57 = vld [vmem:[%s1 + $0x60] sm:$0xf]
    %v58 = vld [vmem:[%s1 + $0x64] sm:$0xf]
    %v59 = vld [vmem:[%s1 + $0x68] sm:$0xf]
    %v60 = vld [vmem:[%s1 + $0x6c] sm:$0xf]
    %v61 = vld [vmem:[%s1 + $0x70] sm:$0xf]
    %v62 = vld [vmem:[%s1 + $0x74] sm:$0xf]
    %v63 = vld [vmem:[%s1 + $0x78] sm:$0xf]
    %v64 = vld [vmem:[%s1 + $0x7c] sm:$0xf]
    %v65 = vld [vmem:[%s1 + $0x80] sm:$0xf]
    %v66 = vld [vmem:[%s1 + $0x84] sm:$0xf]
    %v67 = vld [vmem:[%s1 + $0x88] sm:$0xf]
    %v68 = vld [vmem:[%s1 + $0x8c] sm:$0xf]
    %v69 = vld [vmem:[%s1 + $0x90] sm:$0xf]
    %v70 = vld [vmem:[%s1 + $0x94] sm:$0xf]
    %v71 = vld [vmem:[%s1 + $0x98] sm:$0xf]
    %v72 = vld [vmem:[%s1 + $0x9c] sm:$0xf]
    %v73 = vld [vmem:[%s1 + $0xa0] sm:$0xf]
    %v74 = vld [vmem:[%s1 + $0xa4] sm:$0xf]
    %v75 = vld [vmem:[%s1 + $0xa8] sm:$0xf]
    %v76 = vld [vmem:[%s1 + $0xac] sm:$0xf]
    %v77 = vld [vmem:[%s1 + $0xb0] sm:$0xf]
    %v78 = vld [vmem:[%s1 + $0xb4] sm:$0xf]
    %v79 = vld [vmem:[%s1 + $0xb8] sm:$0xf]
    %v80 = vld [vmem:[%s1 + $0xbc] sm:$0xf]
    %v81 = vld [vmem:[%s1 + $0xc0] sm:$0xf]
    %v82 = vld [vmem:[%s1 + $0xc4] sm:$0xf]
    %v83 = vld [vmem:[%s1 + $0xc8] sm:$0xf]
    %v84 = vld [vmem:[%s1 + $0xcc] sm:$0xf]
    %v85 = vld [vmem:[%s1 + $0xd0] sm:$0xf]
    %v86 = vld [vmem:[%s1 + $0xd4] sm:$0xf]
    %v87 = vld [vmem:[%s1 + $0xd8] sm:$0xf]
    %v88 = vld [vmem:[%s1 + $0xdc] sm:$0xf]
    %v89 = vld [vmem:[%s1 + $0xe0] sm:$0xf]
    %v90 = vld [vmem:[%s1 + $0xe4] sm:$0xf]
    %v91 = vld [vmem:[%s1 + $0xe8] sm:$0xf]
    %v92 = vld [vmem:[%s1 + $0xec] sm:$0xf]
    %v93 = vld [vmem:[%s1 + $0xf0] sm:$0xf]
    %v94 = vld [vmem:[%s1 + $0xf4] sm:$0xf]
    %v95 = vld [vmem:[%s1 + $0xf8] sm:$0xf]
    %v96 = vld [vmem:[%s1 + $0xfc] sm:$0xf]
    %v97 = vld [vmem:[%s2] sm:$0x1]
    %v99 = vperm.slane %v97, 0
    %v165 = vunpack.c.l.b16 %v33
    %v166 = vunpack.c.l.b16 %v34
    %v167 = vunpack.c.l.b16 %v35
    %v168 = vunpack.c.l.b16 %v36
    %v169 = vunpack.c.l.b16 %v37
    %v170 = vunpack.c.l.b16 %v38
    %v171 = vunpack.c.l.b16 %v39
    %v172 = vunpack.c.l.b16 %v40
    %v173 = vunpack.c.l.b16 %v41
    %v174 = vunpack.c.l.b16 %v42
    %v175 = vunpack.c.l.b16 %v43
    %v176 = vunpack.c.l.b16 %v44
    %v177 = vunpack.c.l.b16 %v45
    %v178 = vunpack.c.l.b16 %v46
    %v179 = vunpack.c.l.b16 %v47
    %v180 = vunpack.c.l.b16 %v48
    %v181 = vunpack.c.l.b16 %v49
    %v182 = vunpack.c.l.b16 %v50
    %v183 = vunpack.c.l.b16 %v51
    %v184 = vunpack.c.l.b16 %v52
    %v185 = vunpack.c.l.b16 %v53
    %v186 = vunpack.c.l.b16 %v54
    %v187 = vunpack.c.l.b16 %v55
    %v188 = vunpack.c.l.b16 %v56
    %v189 = vunpack.c.l.b16 %v57
    %v190 = vunpack.c.l.b16 %v58
    %v191 = vunpack.c.l.b16 %v59
    %v192 = vunpack.c.l.b16 %v60
    %v193 = vunpack.c.l.b16 %v61
    %v194 = vunpack.c.l.b16 %v62
    %v195 = vunpack.c.l.b16 %v63
    %v196 = vunpack.c.l.b16 %v64
    %v197 = vunpack.c.l.b16 %v65
    %v198 = vunpack.c.l.b16 %v66
    %v199 = vunpack.c.l.b16 %v67
    %v200 = vunpack.c.l.b16 %v68
    %v201 = vunpack.c.l.b16 %v69
    %v202 = vunpack.c.l.b16 %v70
    %v203 = vunpack.c.l.b16 %v71
    %v204 = vunpack.c.l.b16 %v72
    %v205 = vunpack.c.l.b16 %v73
    %v206 = vunpack.c.l.b16 %v74
    %v207 = vunpack.c.l.b16 %v75
    %v208 = vunpack.c.l.b16 %v76
    %v209 = vunpack.c.l.b16 %v77
    %v210 = vunpack.c.l.b16 %v78
    %v211 = vunpack.c.l.b16 %v79
    %v212 = vunpack.c.l.b16 %v80
    %v213 = vunpack.c.l.b16 %v81
    %v214 = vunpack.c.l.b16 %v82
    %v215 = vunpack.c.l.b16 %v83
    %v216 = vunpack.c.l.b16 %v84
    %v217 = vunpack.c.l.b16 %v85
    %v218 = vunpack.c.l.b16 %v86
    %v219 = vunpack.c.l.b16 %v87
    %v220 = vunpack.c.l.b16 %v88
    %v221 = vunpack.c.l.b16 %v89
    %v222 = vunpack.c.l.b16 %v90
    %v223 = vunpack.c.l.b16 %v91
    %v224 = vunpack.c.l.b16 %v92
    %v225 = vunpack.c.l.b16 %v93
    %v226 = vunpack.c.l.b16 %v94
    %v227 = vunpack.c.l.b16 %v95
    %v228 = vunpack.c.l.b16 %v96
    %v229 = vpack.c.b16 %v166, %v165
    %v230 = vpack.c.b16 %v168, %v167
    %v231 = vpack.c.b16 %v170, %v169
    %v232 = vpack.c.b16 %v172, %v171
    %v233 = vpack.c.b16 %v174, %v173
    %v234 = vpack.c.b16 %v176, %v175
    %v235 = vpack.c.b16 %v178, %v177
    %v236 = vpack.c.b16 %v180, %v179
    %v237 = vpack.c.b16 %v182, %v181
    %v238 = vpack.c.b16 %v184, %v183
    %v239 = vpack.c.b16 %v186, %v185
    %v240 = vpack.c.b16 %v188, %v187
    %v241 = vpack.c.b16 %v190, %v189
    %v242 = vpack.c.b16 %v192, %v191
    %v243 = vpack.c.b16 %v194, %v193
    %v244 = vpack.c.b16 %v196, %v195
    %v245 = vpack.c.b16 %v198, %v197
    %v246 = vpack.c.b16 %v200, %v199
    %v247 = vpack.c.b16 %v202, %v201
    %v248 = vpack.c.b16 %v204, %v203
    %v249 = vpack.c.b16 %v206, %v205
    %v250 = vpack.c.b16 %v208, %v207
    %v251 = vpack.c.b16 %v210, %v209
    %v252 = vpack.c.b16 %v212, %v211
    %v253 = vpack.c.b16 %v214, %v213
    %v254 = vpack.c.b16 %v216, %v215
    %v255 = vpack.c.b16 %v218, %v217
    %v256 = vpack.c.b16 %v220, %v219
    %v257 = vpack.c.b16 %v222, %v221
    %v258 = vpack.c.b16 %v224, %v223
    %v259 = vpack.c.b16 %v226, %v225
    %v260 = vpack.c.b16 %v228, %v227
    %293 = vmatpush.bf16.msra.mxu0 %v236
    %294 = vmatpush.bf16.msra.mxu0 %v235
    %295 = vmatpush.bf16.msra.mxu0 %v234
    %296 = vmatpush.bf16.msra.mxu0 %v233
    %297 = vmatpush.bf16.msra.mxu0 %v232
    %298 = vmatpush.bf16.msra.mxu0 %v231
    %299 = vmatpush.bf16.msra.mxu0 %v230
    %300 = vmatpush.bf16.msra.mxu0 %v229
    %301 = vmatmul.bf16.gmra.mxu0 %v29
    %v302 = vpop.f32.mrf.mxu0
    %v303 = vadd.f32 %v99, %v302
    %v304 = vpop.f32.mrf.mxu0
    %v305 = vadd.f32 %v99, %v304
    %306 = vdwg.mxu0
    %307 = vmatpush.bf16.msra.mxu0 %v244
    %308 = vmatpush.bf16.msra.mxu0 %v243
    %309 = vmatpush.bf16.msra.mxu0 %v242
    %310 = vmatpush.bf16.msra.mxu0 %v241
    %311 = vmatpush.bf16.msra.mxu0 %v240
    %312 = vmatpush.bf16.msra.mxu0 %v239
    %313 = vmatpush.bf16.msra.mxu0 %v238
    %314 = vmatpush.bf16.msra.mxu0 %v237
    %315 = vmatmul.bf16.gmra.mxu0 %v30
    %v316 = vpop.f32.mrf.mxu0
    %v317 = vadd.f32 %v303, %v316
    %v318 = vpop.f32.mrf.mxu0
    %v319 = vadd.f32 %v305, %v318
    %320 = vdwg.mxu0
    %321 = vmatpush.bf16.msra.mxu0 %v252
    %322 = vmatpush.bf16.msra.mxu0 %v251
    %323 = vmatpush.bf16.msra.mxu0 %v250
    %324 = vmatpush.bf16.msra.mxu0 %v249
    %325 = vmatpush.bf16.msra.mxu0 %v248
    %326 = vmatpush.bf16.msra.mxu0 %v247
    %327 = vmatpush.bf16.msra.mxu0 %v246
    %328 = vmatpush.bf16.msra.mxu0 %v245
    %329 = vmatmul.bf16.gmra.mxu0 %v31
    %v330 = vpop.f32.mrf.mxu0
    %v331 = vadd.f32 %v317, %v330
    %v332 = vpop.f32.mrf.mxu0
    %v333 = vadd.f32 %v319, %v332
    %334 = vdwg.mxu0
    %335 = vmatpush.bf16.msra.mxu0 %v260
    %336 = vmatpush.bf16.msra.mxu0 %v259
    %337 = vmatpush.bf16.msra.mxu0 %v258
    %338 = vmatpush.bf16.msra.mxu0 %v257
    %339 = vmatpush.bf16.msra.mxu0 %v256
    %340 = vmatpush.bf16.msra.mxu0 %v255
    %341 = vmatpush.bf16.msra.mxu0 %v254
    %342 = vmatpush.bf16.msra.mxu0 %v253
    %343 = vmatmul.bf16.gmra.mxu0 %v32
    %v344 = vpop.f32.mrf.mxu0
    %v345 = vadd.f32 %v331, %v344
    %v346 = vpop.f32.mrf.mxu0
    %v347 = vadd.f32 %v333, %v346
    %348 = vdwg.mxu0
    %v349 = vmax.f32 %v345, 0.0
    %v350 = vmax.f32 %v347, 0.0
    %v351 = vpack.c.bf16 %v350, %v349
    %v352 = vld [vmem:[%s3] sm:$0xf]
    %v353 = vld [vmem:[%s3 + $0x4] sm:$0xf]
    %v354 = vld [vmem:[%s3 + $0x8] sm:$0xf]
    %v355 = vld [vmem:[%s3 + $0xc] sm:$0xf]
    %v356 = vld [vmem:[%s3 + $0x10] sm:$0xf]
    %v357 = vld [vmem:[%s3 + $0x14] sm:$0xf]
    %v358 = vld [vmem:[%s3 + $0x18] sm:$0xf]
    %v359 = vld [vmem:[%s3 + $0x1c] sm:$0xf]
    %v360 = vld [vmem:[%s3 + $0x20] sm:$0xf]
    %v361 = vld [vmem:[%s3 + $0x24] sm:$0xf]
    %v362 = vld [vmem:[%s3 + $0x28] sm:$0xf]
    %v363 = vld [vmem:[%s3 + $0x2c] sm:$0xf]
    %v364 = vld [vmem:[%s3 + $0x30] sm:$0xf]
    %v365 = vld [vmem:[%s3 + $0x34] sm:$0xf]
    %v366 = vld [vmem:[%s3 + $0x38] sm:$0xf]
    %v367 = vld [vmem:[%s3 + $0x3c] sm:$0xf]
    %v368 = vld [vmem:[%s4] sm:$0x1]
    %v370 = vperm.slane %v368, 0
    %v388 = vunpack.c.l.b16 %v352
    %v389 = vunpack.c.l.b16 %v353
    %v390 = vunpack.c.l.b16 %v354
    %v391 = vunpack.c.l.b16 %v355
    %v392 = vunpack.c.l.b16 %v356
    %v393 = vunpack.c.l.b16 %v357
    %v394 = vunpack.c.l.b16 %v358
    %v395 = vunpack.c.l.b16 %v359
    %v396 = vunpack.c.l.b16 %v360
    %v397 = vunpack.c.l.b16 %v361
    %v398 = vunpack.c.l.b16 %v362
    %v399 = vunpack.c.l.b16 %v363
    %v400 = vunpack.c.l.b16 %v364
    %v401 = vunpack.c.l.b16 %v365
    %v402 = vunpack.c.l.b16 %v366
    %v403 = vunpack.c.l.b16 %v367
    %v404 = vpack.c.b16 %v389, %v388
    %v405 = vpack.c.b16 %v391, %v390
    %v406 = vpack.c.b16 %v393, %v392
    %v407 = vpack.c.b16 %v395, %v394
    %v408 = vpack.c.b16 %v397, %v396
    %v409 = vpack.c.b16 %v399, %v398
    %v410 = vpack.c.b16 %v401, %v400
    %v411 = vpack.c.b16 %v403, %v402
    %420 = vmatpush.bf16.msra.mxu0 %v411
    %421 = vmatpush.bf16.msra.mxu0 %v410
    %422 = vmatpush.bf16.msra.mxu0 %v409
    %423 = vmatpush.bf16.msra.mxu0 %v408
    %424 = vmatpush.bf16.msra.mxu0 %v407
    %425 = vmatpush.bf16.msra.mxu0 %v406
    %426 = vmatpush.bf16.msra.mxu0 %v405
    %427 = vmatpush.bf16.msra.mxu0 %v404
    %428 = vmatmul.bf16.gmra.mxu0 %v351
    %v429 = vpop.f32.mrf.mxu0
    %v430 = vadd.f32 %v370, %v429
    %v431 = vpop.f32.mrf.mxu0
    %v432 = vadd.f32 %v370, %v431
    %433 = vdwg.mxu0
    %434 = vst [vmem:[#allocation2] sm:$0xff] %v430
    %435 = vst [vmem:[#allocation2 + $0x8] sm:$0xff] %v432
    // Predicated region
    $region22: #{ann_forward.1} parent=1 // pred_check
      _
    $region23: #{ann_forward.1} parent=1 // pred_check_branch
      %437 = sbr.rel (0) target = $region25
    $region24: #{ann_forward.1} parent=1 // pred_region
      %439 = vsyncadd [#allocation3], 0
      %s440 = sshll.u32 [#allocation2], 4
      %s441 = int_to_ptr.vmem [resolvable:$true] %s440
      %s442 = sshll.u32 %s5, 4
      %s443 = int_to_ptr.hbm [resolvable:$true] %s442
      %448 = dma.vmem_to_hbm [thread:$0]  %s441, 256, %s443, [#allocation3], 128, 128, 8
    $region25: #{ann_forward.1} parent=1 // pred_fallthru
      _
    // Predicated region
    $region26: #{ann_forward.1} parent=1 // pred_check
      _
    $region27: #{ann_forward.1} parent=1 // pred_check_branch
      %450 = sbr.rel (0) target = $region29
    $region28: #{ann_forward.1} parent=1 // pred_region
      %452 = dma.done [#allocation3], 256
    $region29: #{ann_forward.1} parent=1 // pred_fallthru
      _
    %453 = vsyncpa [#allocation3], 1

</llo_original>
